<compile_context>
chip_gen: v7x
topology: tpu7x:2x2x1
jax: 0.10.0
libtpu: 0.0.40
codegen_flags: <defaults>
</compile_context>

<pallas_src>
import jax
import jax.numpy as jnp
from jax.experimental import pallas as pl
from jax.experimental.pallas import tpu as pltpu


IN_DIM = 6
HIDDEN = 128
N_ACTIONS = 3
HEAD_DIM = N_ACTIONS + 1  # 3 action logits + 1 value, lane-packed


def _round_up(n, m):
    return ((n + m - 1) // m) * m


def _policy_kernel(x_ref, w1_ref, b1_ref, wh_ref, bh_ref, out_ref):
    # Hidden layer: ReLU(x @ W1 + b1)
    x = x_ref[...]
    h = jnp.dot(x, w1_ref[...], preferred_element_type=jnp.float32)
    h = jnp.maximum(h + b1_ref[...], 0.0)          # b1 is [1, 128], broadcasts

    # Fused heads: logits[:, 0:3] = action logits, logits[:, 3] = state value
    logits = jnp.dot(h, wh_ref[...], preferred_element_type=jnp.float32)
    logits = logits + bh_ref[...]

    # Max-stabilized softmax over the action lanes only (lane 3 masked out),
    # all ops stay on the full [TB, 4] tile -- no narrow column slices.
    lane = jax.lax.broadcasted_iota(jnp.int32, logits.shape, 1)
    is_action = lane < N_ACTIONS
    masked = jnp.where(is_action, logits, -jnp.inf)
    m = jnp.max(masked, axis=-1, keepdims=True)
    e = jnp.exp(masked - m)                        # lane 3 -> exp(-inf) = 0
    denom = jnp.sum(e, axis=-1, keepdims=True)
    probs = e / denom

    # Lane-packed output: probs in lanes 0..2, raw value head in lane 3.
    out_ref[...] = jnp.where(is_action, probs, logits)


def policy_forward(x, params, *, block_b=1024):
    """x: [B, 6] float32. params: dict of weights/biases. Returns (probs, values)."""
    B = x.shape[0]
    w1, b1 = params["w1"], params["b1"]
    # Fuse the two heads on the host: [128, 4] weight, [1, 4] bias.
    w_head = jnp.concatenate([params["w2"], params["w3"]], axis=1)
    b_head = jnp.concatenate([params["b2"], params["b3"]], axis=1)

    # Pick a batch tile: big (default 1024) for throughput, shrunk (and kept a
    # multiple of 8 sublanes) for tiny batches so we don't over-pad.
    tb = min(block_b, _round_up(B, 8))
    b_pad = _round_up(B, tb)
    if b_pad != B:
        x = jnp.pad(x, ((0, b_pad - B), (0, 0)))

    out = pl.pallas_call(
        _policy_kernel,
        out_shape=jax.ShapeDtypeStruct((b_pad, HEAD_DIM), jnp.float32),
        grid=(b_pad // tb,),
        in_specs=[
            pl.BlockSpec((tb, IN_DIM), lambda i: (i, 0)),          # x: batch-tiled
            pl.BlockSpec((IN_DIM, HIDDEN), lambda i: (0, 0)),      # W1: resident
            pl.BlockSpec((1, HIDDEN), lambda i: (0, 0)),           # b1: resident
            pl.BlockSpec((HIDDEN, HEAD_DIM), lambda i: (0, 0)),    # W_head: resident
            pl.BlockSpec((1, HEAD_DIM), lambda i: (0, 0)),         # b_head: resident
        ],
        out_specs=pl.BlockSpec((tb, HEAD_DIM), lambda i: (i, 0)),
        compiler_params=pltpu.CompilerParams(
            dimension_semantics=("parallel",),   # megacore sharding on v7x
        ),
    )(x, w1, b1, w_head, b_head)

    probs = out[:B, :N_ACTIONS]
    values = out[:B, N_ACTIONS:HEAD_DIM]
    return probs, values


def init_params(key):
    """Deterministic init matching the PyTorch module's shapes.
    PyTorch nn.Linear default init: U(-1/sqrt(fan_in), 1/sqrt(fan_in))."""
    k1, k2, k3, k4, k5, k6 = jax.random.split(key, 6)

    def uniform(k, shape, fan_in):
        bound = 1.0 / jnp.sqrt(jnp.float32(fan_in))
        return jax.random.uniform(k, shape, jnp.float32, -bound, bound)

    return {
        # affine1: Linear(6, 128)
        "w1": uniform(k1, (IN_DIM, HIDDEN), IN_DIM),
        "b1": uniform(k2, (1, HIDDEN), IN_DIM),
        # action_head: Linear(128, 3)
        "w2": uniform(k3, (HIDDEN, N_ACTIONS), HIDDEN),
        "b2": uniform(k4, (1, N_ACTIONS), HIDDEN),
        # value_head: Linear(128, 1)
        "w3": uniform(k5, (HIDDEN, 1), HIDDEN),
        "b3": uniform(k6, (1, 1), HIDDEN),
    }


def _reference(x, params):
    h = jnp.maximum(x @ params["w1"] + params["b1"], 0.0)
    probs = jax.nn.softmax(h @ params["w2"] + params["b2"], axis=-1)
    values = h @ params["w3"] + params["b3"]
    return probs, values


if __name__ == "__main__":
    key = jax.random.PRNGKey(0)
    pkey, xkey1, xkey2 = jax.random.split(key, 3)
    params = init_params(pkey)

    # Case 1: small, sublane-aligned batch.
    B1 = 8
    x1 = jax.random.normal(xkey1, (B1, IN_DIM), jnp.float32)
    probs1, values1 = policy_forward(x1, params)
    jax.block_until_ready((probs1, values1))
    probs1_ref, values1_ref = _reference(x1, params)
    assert probs1.shape == (B1, N_ACTIONS) and values1.shape == (B1, 1)
    assert jnp.allclose(probs1, probs1_ref, atol=1e-5, rtol=1e-5)
    assert jnp.allclose(values1, values1_ref, atol=1e-5, rtol=1e-5)
    assert jnp.allclose(jnp.sum(probs1, axis=-1), 1.0, atol=1e-5)

    # Case 2: ragged batch exercising the zero-pad + tail-slice path.
    B2 = 13
    x2 = jax.random.normal(xkey2, (B2, IN_DIM), jnp.float32)
    probs2, values2 = policy_forward(x2, params)
    jax.block_until_ready((probs2, values2))
    probs2_ref, values2_ref = _reference(x2, params)
    assert probs2.shape == (B2, N_ACTIONS) and values2.shape == (B2, 1)
    assert jnp.allclose(probs2, probs2_ref, atol=1e-5, rtol=1e-5)
    assert jnp.allclose(values2, values2_ref, atol=1e-5, rtol=1e-5)
    assert jnp.allclose(jnp.sum(probs2, axis=-1), 1.0, atol=1e-5)

    print("KERNEL_OK")
</pallas_src>

<mosaic_0001>
module attributes {stable_mosaic.version = 11 : i64} {
  func.func @_policy_kernel(%arg0: i32, %arg1: memref<8x6xf32, #tpu.memory_space<vmem>>, %arg2: memref<6x128xf32, #tpu.memory_space<vmem>>, %arg3: memref<1x128xf32, #tpu.memory_space<vmem>>, %arg4: memref<128x4xf32, #tpu.memory_space<vmem>>, %arg5: memref<1x4xf32, #tpu.memory_space<vmem>>, %arg6: memref<8x4xf32, #tpu.memory_space<vmem>>) attributes {dimension_semantics = [#tpu.dimension_semantics<parallel>], iteration_bounds = array<i64: 1>, scalar_prefetch = 0 : i64, scratch_operands = 0 : i64, tpu.core_type = #tpu.core_type<tc>, window_params = [{transform_indices = @transform_0, window_bounds = array<i64: 8, 6>}, {pipeline_mode = #tpu.pipeline_mode<synchronous>, transform_indices = @transform_1, window_bounds = array<i64: 6, 128>}, {pipeline_mode = #tpu.pipeline_mode<synchronous>, transform_indices = @transform_2, window_bounds = array<i64: 1, 128>}, {pipeline_mode = #tpu.pipeline_mode<synchronous>, transform_indices = @transform_3, window_bounds = array<i64: 128, 4>}, {pipeline_mode = #tpu.pipeline_mode<synchronous>, transform_indices = @transform_4, window_bounds = array<i64: 1, 4>}, {transform_indices = @transform_5, window_bounds = array<i64: 8, 4>}]} {
    %c0 = arith.constant 0 : index
    %c0_0 = arith.constant 0 : index
    %0 = vector.load %arg1[%c0, %c0_0] : memref<8x6xf32, #tpu.memory_space<vmem>>, vector<8x6xf32>
    %c0_1 = arith.constant 0 : index
    %c0_2 = arith.constant 0 : index
    %1 = vector.load %arg2[%c0_1, %c0_2] : memref<6x128xf32, #tpu.memory_space<vmem>>, vector<6x128xf32>
    %cst = arith.constant dense<0.000000e+00> : vector<8x128xf32>
    %2 = tpu.matmul %0, %1, %cst {dimension_numbers = #tpu.dot_dimension_numbers<[1], [0], [0], [1], [0, 0, 1, 1], [], []>} : vector<8x6xf32>, vector<6x128xf32>, vector<8x128xf32> -> vector<8x128xf32>
    %c0_3 = arith.constant 0 : index
    %c0_4 = arith.constant 0 : index
    %3 = vector.load %arg3[%c0_3, %c0_4] : memref<1x128xf32, #tpu.memory_space<vmem>>, vector<1x128xf32>
    %4 = vector.broadcast %3 : vector<1x128xf32> to vector<8x128xf32>
    %5 = arith.addf %2, %4 : vector<8x128xf32>
    %cst_5 = arith.constant 0.000000e+00 : f32
    %6 = vector.broadcast %cst_5 : f32 to vector<8x128xf32>
    %7 = arith.maximumf %5, %6 : vector<8x128xf32>
    %c0_6 = arith.constant 0 : index
    %c0_7 = arith.constant 0 : index
    %8 = vector.load %arg4[%c0_6, %c0_7] : memref<128x4xf32, #tpu.memory_space<vmem>>, vector<128x4xf32>
    %cst_8 = arith.constant dense<0.000000e+00> : vector<8x4xf32>
    %9 = tpu.matmul %7, %8, %cst_8 {dimension_numbers = #tpu.dot_dimension_numbers<[1], [0], [0], [1], [0, 0, 1, 1], [], []>} : vector<8x128xf32>, vector<128x4xf32>, vector<8x4xf32> -> vector<8x4xf32>
    %c0_9 = arith.constant 0 : index
    %c0_10 = arith.constant 0 : index
    %10 = vector.load %arg5[%c0_9, %c0_10] : memref<1x4xf32, #tpu.memory_space<vmem>>, vector<1x4xf32>
    %11 = vector.broadcast %10 : vector<1x4xf32> to vector<8x4xf32>
    %12 = arith.addf %9, %11 : vector<8x4xf32>
    %13 = tpu.iota {dimensions = array<i32: 1>} : vector<8x4xi32>
    %c3_i32 = arith.constant 3 : i32
    %14 = vector.broadcast %c3_i32 : i32 to vector<8x4xi32>
    %15 = arith.cmpi slt, %13, %14 : vector<8x4xi32>
    %cst_11 = arith.constant 0xFF800000 : f32
    %16 = vector.broadcast %cst_11 : f32 to vector<8x4xf32>
    %17 = arith.select %15, %12, %16 : vector<8x4xi1>, vector<8x4xf32>
    %cst_12 = arith.constant dense<0xFF800000> : vector<8xf32>
    %18 = vector.multi_reduction <maximumf>, %17, %cst_12 [1] : vector<8x4xf32> to vector<8xf32>
    %19 = vector.shape_cast %18 : vector<8xf32> to vector<8x1xf32>
    %20 = vector.broadcast %19 : vector<8x1xf32> to vector<8x4xf32>
    %21 = arith.subf %17, %20 : vector<8x4xf32>
    %22 = math.exp %21 : vector<8x4xf32>
    %cst_13 = arith.constant dense<0.000000e+00> : vector<8xf32>
    %23 = vector.multi_reduction <add>, %22, %cst_13 [1] : vector<8x4xf32> to vector<8xf32>
    %24 = vector.shape_cast %23 : vector<8xf32> to vector<8x1xf32>
    %25 = vector.broadcast %24 : vector<8x1xf32> to vector<8x4xf32>
    %26 = arith.divf %22, %25 : vector<8x4xf32>
    %27 = arith.select %15, %26, %12 : vector<8x4xi1>, vector<8x4xf32>
    %c0_14 = arith.constant 0 : index
    %c0_15 = arith.constant 0 : index
    %28 = vector.load %arg6[%c0_14, %c0_15] : memref<8x4xf32, #tpu.memory_space<vmem>>, vector<8x4xf32>
    tpu.vector_store %arg6[%c0_14, %c0_15], %27 {strides = array<i32>} : memref<8x4xf32, #tpu.memory_space<vmem>>, vector<8x4xf32>,
    return
  }
  func.func @transform_0(%arg0: i32) -> (i32, i32) {
    %c0_i32 = arith.constant 0 : i32
    %c0_i32_0 = arith.constant 0 : i32
    return %arg0, %c0_i32 : i32, i32
  }
  func.func @transform_1(%arg0: i32) -> (i32, i32) {
    %c0_i32 = arith.constant 0 : i32
    %c0_i32_0 = arith.constant 0 : i32
    %c0_i32_1 = arith.constant 0 : i32
    return %c0_i32, %c0_i32_0 : i32, i32
  }
  func.func @transform_2(%arg0: i32) -> (i32, i32) {
    %c0_i32 = arith.constant 0 : i32
    %c0_i32_0 = arith.constant 0 : i32
    %c0_i32_1 = arith.constant 0 : i32
    return %c0_i32, %c0_i32_0 : i32, i32
  }
  func.func @transform_3(%arg0: i32) -> (i32, i32) {
    %c0_i32 = arith.constant 0 : i32
    %c0_i32_0 = arith.constant 0 : i32
    %c0_i32_1 = arith.constant 0 : i32
    return %c0_i32, %c0_i32_0 : i32, i32
  }
  func.func @transform_4(%arg0: i32) -> (i32, i32) {
    %c0_i32 = arith.constant 0 : i32
    %c0_i32_0 = arith.constant 0 : i32
    %c0_i32_1 = arith.constant 0 : i32
    return %c0_i32, %c0_i32_0 : i32, i32
  }
  func.func @transform_5(%arg0: i32) -> (i32, i32) {
    %c0_i32 = arith.constant 0 : i32
    %c0_i32_0 = arith.constant 0 : i32
    return %arg0, %c0_i32 : i32, i32
  }
}

</mosaic_0001>

<llo_original>
// kernel: tpu_custom_call.1
$region0: #{tpu_custom_call.1}
  #allocation0 [shape = 'u32[]', space=smem, size = 0x4, offset = 0x4, fixed_abs, tag = 'smem constant byte address 0x4 - core index']
  #allocation1 [shape = 'u32[144,128]{1,0:T(1,128)}', space=vmem, size = 0x12000, scoped, tag = 'internal scratch']
  %s0 = inlined_call_operand.vmem [shape: f32[8,6], index: 0, kind: input, shape index: {}]
  %s1 = inlined_call_operand.vmem [shape: f32[6,128], index: 1, kind: input, shape index: {}]
  %s2 = inlined_call_operand.vmem [shape: f32[1,128], index: 2, kind: input, shape index: {}]
  %s3 = inlined_call_operand.vmem [shape: f32[128,4], index: 3, kind: input, shape index: {}]
  %s4 = inlined_call_operand.vmem [shape: f32[1,4], index: 4, kind: input, shape index: {}]
  %s5 = inlined_call_operand.vmem [shape: f32[8,4], index: 5, kind: output, shape index: {}]
  %s6 = sld [smem:[#allocation0]]
  $region30: #{tpu_custom_call.1} parent=0
    _
  %s8 = ssub.s32 1, %s6
  %s9 = scalar_select 0, %s8, %s6
  // Predicated region
  $region2: #{tpu_custom_call.1} parent=0 // pred_check
    _
  $region3: #{tpu_custom_call.1} parent=0 // pred_check_branch
    %11 = sbr.rel (0) target = $region5
  $region4: #{tpu_custom_call.1} parent=0 // pred_region
    _
  $region5: #{tpu_custom_call.1} parent=0 // pred_fallthru
    _
  // Predicated region
  $region6: #{tpu_custom_call.1} parent=0 // pred_check
    _
  $region7: #{tpu_custom_call.1} parent=0 // pred_check_branch
    %13 = sbr.rel (0) target = $region9
  $region8: #{tpu_custom_call.1} parent=0 // pred_region
    _
  $region9: #{tpu_custom_call.1} parent=0 // pred_fallthru
    _
  // Predicated region
  $region10: #{tpu_custom_call.1} parent=0 // pred_check
    _
  $region11: #{tpu_custom_call.1} parent=0 // pred_check_branch
    %15 = sbr.rel (0) target = $region13
  $region12: #{tpu_custom_call.1} parent=0 // pred_region
    _
  $region13: #{tpu_custom_call.1} parent=0 // pred_fallthru
    _
  // Predicated region
  $region14: #{tpu_custom_call.1} parent=0 // pred_check
    _
  $region15: #{tpu_custom_call.1} parent=0 // pred_check_branch
    %17 = sbr.rel (0) target = $region17
  $region16: #{tpu_custom_call.1} parent=0 // pred_region
    _
  $region17: #{tpu_custom_call.1} parent=0 // pred_fallthru
    _
  // Predicated region
  $region18: #{tpu_custom_call.1} parent=0 // pred_check
    _
  $region19: #{tpu_custom_call.1} parent=0 // pred_check_branch
    %19 = sbr.rel (0) target = $region21
  $region20: #{tpu_custom_call.1} parent=0 // pred_region
    _
  $region21: #{tpu_custom_call.1} parent=0 // pred_fallthru
    _
  %v20 = vld [vmem:[%s0] sm:$0xff]
  %v21 = vld [vmem:[%s1] sm:$0x3f]
  %v22 = vld [vmem:[%s2] sm:$0x1]
  %v24 = vlaneseq
  %v25 = vshrl.u32 %v24, 7
  %v26 = vsub.s32 0, %v25
  %v27 = vrot.slane %v22, %v26
  %vm29 = vcmask 48128
  %v31 = vsel %vm29, %v20, 0
  %vm33 = vcmask 1045504
  %v35 = vsel %vm33, %v21, 0
  %37 = vmatprep.subr.mxu0 0.0
  %38 = vmatpush1.msra.mxu0 %v35
  %39 = vmatprep.subr.mxu0 0.0
  %40 = vmatpush1.msra.mxu0 0.0
  %41 = vmatprep.subr.mxu0 0.0
  %42 = vmatpush1.msra.mxu0 0.0
  %43 = vmatprep.subr.mxu0 0.0
  %44 = vmatpush1.msra.mxu0 0.0
  %45 = vmatprep.subr.mxu0 0.0
  %46 = vmatpush1.msra.mxu0 0.0
  %47 = vmatprep.subr.mxu0 0.0
  %48 = vmatpush1.msra.mxu0 0.0
  %49 = vmatprep.subr.mxu0 0.0
  %50 = vmatpush1.msra.mxu0 0.0
  %51 = vmatprep.subr.mxu0 0.0
  %52 = vmatpush1.msra.mxu0 0.0
  %53 = vmatprep.subr.mxu0 0.0
  %54 = vmatpush1.msra.mxu0 0.0
  %55 = vmatprep.subr.mxu0 0.0
  %56 = vmatpush1.msra.mxu0 0.0
  %57 = vmatprep.subr.mxu0 0.0
  %58 = vmatpush1.msra.mxu0 0.0
  %59 = vmatprep.subr.mxu0 0.0
  %60 = vmatpush1.msra.mxu0 0.0
  %61 = vmatprep.subr.mxu0 0.0
  %62 = vmatpush1.msra.mxu0 0.0
  %63 = vmatprep.subr.mxu0 0.0
  %64 = vmatpush1.msra.mxu0 0.0
  %65 = vmatprep.subr.mxu0 0.0
  %66 = vmatpush1.msra.mxu0 0.0
  %67 = vmatprep.subr.mxu0 0.0
  %68 = vmatpush1.msra.mxu0 0.0
  %69 = vmatprep.subr.mxu0 0.0
  %70 = vmatpush1.msra.mxu0 0.0
  %71 = vmatprep.subr.mxu0 0.0
  %72 = vmatpush1.msra.mxu0 0.0
  %73 = vmatprep.subr.mxu0 0.0
  %74 = vmatpush1.msra.mxu0 0.0
  %75 = vmatprep.subr.mxu0 0.0
  %76 = vmatpush1.msra.mxu0 0.0
  %77 = vmatprep.subr.mxu0 0.0
  %78 = vmatpush1.msra.mxu0 0.0
  %79 = vmatprep.subr.mxu0 0.0
  %80 = vmatpush1.msra.mxu0 0.0
  %81 = vmatprep.subr.mxu0 0.0
  %82 = vmatpush1.msra.mxu0 0.0
  %83 = vmatprep.subr.mxu0 0.0
  %84 = vmatpush1.msra.mxu0 0.0
  %85 = vmatprep.subr.mxu0 0.0
  %86 = vmatpush1.msra.mxu0 0.0
  %87 = vmatprep.subr.mxu0 0.0
  %88 = vmatpush1.msra.mxu0 0.0
  %89 = vmatprep.subr.mxu0 0.0
  %90 = vmatpush1.msra.mxu0 0.0
  %91 = vmatprep.subr.mxu0 0.0
  %92 = vmatpush1.msra.mxu0 0.0
  %93 = vmatprep.subr.mxu0 0.0
  %94 = vmatpush1.msra.mxu0 0.0
  %95 = vmatprep.subr.mxu0 0.0
  %96 = vmatpush1.msra.mxu0 0.0
  %97 = vmatprep.subr.mxu0 0.0
  %98 = vmatpush1.msra.mxu0 0.0
  %99 = vmatprep.subr.mxu0 0.0
  %100 = vmatpush1.msra.mxu0 0.0
  %101 = vmatprep.mubr.f32.mxu0 0.0
  %102 = vmatmul.mubr.f32.gmra.mrb[0].mxu0 %v31
  %v103 = vpop.f32.mrb[0].mxu0
  %v104 = vadd.f32 %v27, %v103
  %v105 = vpop.f32.mrb[0].mxu0
  %106 = vdwg.mxu0
  %v107 = vmax.f32 %v104, 0.0
  %v108 = vld [vmem:[%s3] sm:$0xff]
  %v109 = vld [vmem:[%s3 + $0x8] sm:$0xff]
  %v110 = vld [vmem:[%s3 + $0x10] sm:$0xff]
  %v111 = vld [vmem:[%s3 + $0x18] sm:$0xff]
  %v112 = vld [vmem:[%s3 + $0x20] sm:$0xff]
  %v113 = vld [vmem:[%s3 + $0x28] sm:$0xff]
  %v114 = vld [vmem:[%s3 + $0x30] sm:$0xff]
  %v115 = vld [vmem:[%s3 + $0x38] sm:$0xff]
  %v116 = vld [vmem:[%s3 + $0x40] sm:$0xff]
  %v117 = vld [vmem:[%s3 + $0x48] sm:$0xff]
  %v118 = vld [vmem:[%s3 + $0x50] sm:$0xff]
  %v119 = vld [vmem:[%s3 + $0x58] sm:$0xff]
  %v120 = vld [vmem:[%s3 + $0x60] sm:$0xff]
  %v121 = vld [vmem:[%s3 + $0x68] sm:$0xff]
  %v122 = vld [vmem:[%s3 + $0x70] sm:$0xff]
  %v123 = vld [vmem:[%s3 + $0x78] sm:$0xff]
  %v124 = vld [vmem:[%s4] sm:$0x1]
  %v126 = vlaneseq
  %v127 = vshrl.u32 %v126, 7
  %v128 = vsub.s32 0, %v127
  %v129 = vrot.slane %v124, %v128
  %131 = vmatprep.subr.mxu0 0.0
  %132 = vmatpush1.msra.mxu0 %v108
  %133 = vmatprep.subr.mxu0 0.0
  %134 = vmatpush1.msra.mxu0 %v109
  %135 = vmatprep.subr.mxu0 0.0
  %136 = vmatpush1.msra.mxu0 %v110
  %137 = vmatprep.subr.mxu0 0.0
  %138 = vmatpush1.msra.mxu0 %v111
  %139 = vmatprep.subr.mxu0 0.0
  %140 = vmatpush1.msra.mxu0 %v112
  %141 = vmatprep.subr.mxu0 0.0
  %142 = vmatpush1.msra.mxu0 %v113
  %143 = vmatprep.subr.mxu0 0.0
  %144 = vmatpush1.msra.mxu0 %v114
  %145 = vmatprep.subr.mxu0 0.0
  %146 = vmatpush1.msra.mxu0 %v115
  %147 = vmatprep.subr.mxu0 0.0
  %148 = vmatpush1.msra.mxu0 %v116
  %149 = vmatprep.subr.mxu0 0.0
  %150 = vmatpush1.msra.mxu0 %v117
  %151 = vmatprep.subr.mxu0 0.0
  %152 = vmatpush1.msra.mxu0 %v118
  %153 = vmatprep.subr.mxu0 0.0
  %154 = vmatpush1.msra.mxu0 %v119
  %155 = vmatprep.subr.mxu0 0.0
  %156 = vmatpush1.msra.mxu0 %v120
  %157 = vmatprep.subr.mxu0 0.0
  %158 = vmatpush1.msra.mxu0 %v121
  %159 = vmatprep.subr.mxu0 0.0
  %160 = vmatpush1.msra.mxu0 %v122
  %161 = vmatprep.subr.mxu0 0.0
  %162 = vmatpush1.msra.mxu0 %v123
  %163 = vmatprep.subr.mxu0 0.0
  %164 = vmatpush1.msra.mxu0 0.0
  %165 = vmatprep.subr.mxu0 0.0
  %166 = vmatpush1.msra.mxu0 0.0
  %167 = vmatprep.subr.mxu0 0.0
  %168 = vmatpush1.msra.mxu0 0.0
  %169 = vmatprep.subr.mxu0 0.0
  %170 = vmatpush1.msra.mxu0 0.0
  %171 = vmatprep.subr.mxu0 0.0
  %172 = vmatpush1.msra.mxu0 0.0
  %173 = vmatprep.subr.mxu0 0.0
  %174 = vmatpush1.msra.mxu0 0.0
  %175 = vmatprep.subr.mxu0 0.0
  %176 = vmatpush1.msra.mxu0 0.0
  %177 = vmatprep.subr.mxu0 0.0
  %178 = vmatpush1.msra.mxu0 0.0
  %179 = vmatprep.subr.mxu0 0.0
  %180 = vmatpush1.msra.mxu0 0.0
  %181 = vmatprep.subr.mxu0 0.0
  %182 = vmatpush1.msra.mxu0 0.0
  %183 = vmatprep.subr.mxu0 0.0
  %184 = vmatpush1.msra.mxu0 0.0
  %185 = vmatprep.subr.mxu0 0.0
  %186 = vmatpush1.msra.mxu0 0.0
  %187 = vmatprep.subr.mxu0 0.0
  %188 = vmatpush1.msra.mxu0 0.0
  %189 = vmatprep.subr.mxu0 0.0
  %190 = vmatpush1.msra.mxu0 0.0
  %191 = vmatprep.subr.mxu0 0.0
  %192 = vmatpush1.msra.mxu0 0.0
  %193 = vmatprep.subr.mxu0 0.0
  %194 = vmatpush1.msra.mxu0 0.0
  %195 = vmatprep.mubr.f32.mxu0 0.0
  %196 = vmatmul.mubr.f32.gmra.mrb[0].mxu0 %v107
  %v197 = vpop.f32.mrb[0].mxu0
  %v198 = vadd.f32 %v129, %v197
  %v199 = vpop.f32.mrb[0].mxu0
  %200 = vdwg.mxu0
  %v201 = vlaneseq
  %v202 = vand.u32 %v201, 127
  %vm203 = vcmp.lt.s32.totalorder %v202, 3
  %v204 = vsel %vm203, %v198, -inf
  %vm205 = vcmask 31744
  %v206 = vsel %vm205, %v204, -inf
  %207 = vmax.xlane.f32.xlu0 %v206
  %v208 = vpop.xlane.xlu0 %207
  %v209 = vsub.f32 %v204, %v208
  %v210 = vmul.f32 %v209, 1.442695
  %v211 = vpow.pop %v210
  %v212 = vsel %vm205, %v211, 0.0
  %213 = vadd.xlane.f32.xlu0 %v212
  %v214 = vpop.xlane.xlu0 %213
  %v215 = vrcp.pop %v214
  %v216 = vmul.f32 %v211, %v215
  %v217 = vsel %vm203, %v216, %v198
  %218 = vst.msk [vmem:[%s5] sm:$0xff] %vm205, %v217
  // Predicated region
  $region22: #{tpu_custom_call.1} parent=0 // pred_check
    _
  $region23: #{tpu_custom_call.1} parent=0 // pred_check_branch
    %220 = sbr.rel (0) target = $region25
  $region24: #{tpu_custom_call.1} parent=0 // pred_region
    _
  $region25: #{tpu_custom_call.1} parent=0 // pred_fallthru
    _
  // Predicated region
  $region26: #{tpu_custom_call.1} parent=0 // pred_check
    _
  $region27: #{tpu_custom_call.1} parent=0 // pred_check_branch
    %222 = sbr.rel (0) target = $region29
  $region28: #{tpu_custom_call.1} parent=0 // pred_region
    _
  $region29: #{tpu_custom_call.1} parent=0 // pred_fallthru
    _

</llo_original>
